<compile_context>
chip_gen: v6e
topology: v6e:2x2x1
jax: 0.10.0
libtpu: 0.0.40
codegen_flags: <defaults>
</compile_context>

<pallas_src>
import jax
import jax.numpy as jnp
from jax import lax
from jax.experimental import pallas as pl
from jax.experimental.pallas import tpu as pltpu


_SQRT_HALF = 0.7071067811865476


def _round_up(n, m):
    return (n + m - 1) // m * m


def _gelu_exact_f32(h):
    # Exact erf-based GELU (matches nn.GELU() default numerics), computed in f32.
    return 0.5 * h * (1.0 + lax.erf(h * jnp.float32(_SQRT_HALF)))


# ---------------------------------------------------------------------------
# Kernel A: weights fully resident in VMEM (normal ViT shapes).
# ---------------------------------------------------------------------------
def ffn_resident_kernel(x_ref, w1_ref, b1_ref, w2_ref, b2_ref, o_ref):
    # x tile arrives in its native dtype; cast to bf16 only at the MXU boundary.
    x = x_ref[...].astype(jnp.bfloat16)
    h = jnp.dot(x, w1_ref[...], preferred_element_type=jnp.float32) + b1_ref[...]
    h = _gelu_exact_f32(h)
    # Dropout(p=0.0) == identity.
    out = jnp.dot(h.astype(jnp.bfloat16), w2_ref[...], preferred_element_type=jnp.float32)
    o_ref[...] = (out + b2_ref[...]).astype(o_ref.dtype)


# ---------------------------------------------------------------------------
# Kernel B: hidden-dimension-tiled fallback (v7x / very large dim*hidden).
# Grid = (row tiles [parallel], hidden tiles [arbitrary]); f32 accumulator in scratch.
# ---------------------------------------------------------------------------
def ffn_hidden_tiled_kernel(x_ref, w1_ref, b1_ref, w2_ref, b2_ref, o_ref, acc_ref):
    j = pl.program_id(1)

    @pl.when(j == 0)
    def _():
        acc_ref[...] = jnp.zeros_like(acc_ref)

    x = x_ref[...].astype(jnp.bfloat16)
    h = jnp.dot(x, w1_ref[...], preferred_element_type=jnp.float32) + b1_ref[...]
    h = _gelu_exact_f32(h)
    acc_ref[...] += jnp.dot(h.astype(jnp.bfloat16), w2_ref[...],
                            preferred_element_type=jnp.float32)

    @pl.when(j == pl.num_programs(1) - 1)
    def _():
        o_ref[...] = (acc_ref[...] + b2_ref[...]).astype(o_ref.dtype)


# ---------------------------------------------------------------------------
# One-time parameter preparation (pad to lane-dense multiples of 128, cast to bf16).
# Zero padding is exact: padded b1 columns are 0, GELU(0)=0, padded w2 rows are 0.
# ---------------------------------------------------------------------------
def prepare_params(params):
    if "dim" in params:   # already prepared
        return params
    w1, b1, w2, b2 = params["w1"], params["b1"], params["w2"], params["b2"]
    dim, hidden = w1.shape
    out_dim = w2.shape[1]
    dim_p = _round_up(dim, 128)
    hid_p = _round_up(hidden, 128)
    out_p = _round_up(out_dim, 128)
    w1p = jnp.pad(w1, ((0, dim_p - dim), (0, hid_p - hidden))).astype(jnp.bfloat16)
    b1p = jnp.pad(b1, (0, hid_p - hidden)).reshape(1, hid_p).astype(jnp.float32)
    w2p = jnp.pad(w2, ((0, hid_p - hidden), (0, out_p - out_dim))).astype(jnp.bfloat16)
    b2p = jnp.pad(b2, (0, out_p - out_dim)).reshape(1, out_p).astype(jnp.float32)
    return {"w1": w1p, "b1": b1p, "w2": w2p, "b2": b2p,
            "dim": dim, "hidden": hidden, "out_dim": out_dim}


def _vmem_cap_bytes():
    cap = 64 << 20  # conservative (v7x per-TC) if detection fails
    try:
        cap = int(pltpu.get_tpu_info().vmem_capacity_bytes)
    except Exception:
        pass
    # Leave headroom for compiler internal scratch / semaphores: ~82% of physical.
    return max(int(cap * 0.82), 40 << 20)


def _choose_tm(M):
    """Row-tile choice: multiple of 16, minimize last-tile waste, >=2 steps when feasible."""
    M16 = _round_up(max(M, 16), 16)
    if M16 <= 128:
        return M16
    if M16 <= 1024:
        # Split into two steps so both v7x TensorCores get work on the "parallel" axis.
        return _round_up((M16 + 1) // 2, 16)
    best_tm, best_waste = 128, None
    for tm in (512, 384, 256, 128):
        waste = _round_up(M, tm) / M
        if best_waste is None or waste < best_waste - 1e-9:
            best_tm, best_waste = tm, waste
    return best_tm


def _call_resident(x2d, w1p, b1p, w2p, b2p, *, tm, out_dtype, vmem_limit, single_buffer):
    M_pad, dim_p = x2d.shape
    hid_p = w1p.shape[1]
    out_p = w2p.shape[1]

    if single_buffer:
        res_spec = lambda shape: pl.BlockSpec(shape, lambda i: (0, 0),
                                              pipeline_mode=pl.Buffered(1))
    else:
        res_spec = lambda shape: pl.BlockSpec(shape, lambda i: (0, 0))

    return pl.pallas_call(
        ffn_resident_kernel,
        out_shape=jax.ShapeDtypeStruct((M_pad, out_p), out_dtype),
        grid_spec=pltpu.PrefetchScalarGridSpec(
            num_scalar_prefetch=0,
            grid=(M_pad // tm,),
            in_specs=[
                pl.BlockSpec((tm, dim_p), lambda i: (i, 0)),   # x row tile
                res_spec((dim_p, hid_p)),                      # w1 (bf16, resident)
                res_spec((1, hid_p)),                          # b1 (f32)
                res_spec((hid_p, out_p)),                      # w2 (bf16, resident)
                res_spec((1, out_p)),                          # b2 (f32)
            ],
            out_specs=pl.BlockSpec((tm, out_p), lambda i: (i, 0)),
        ),
        compiler_params=pltpu.CompilerParams(
            dimension_semantics=("parallel",),
            vmem_limit_bytes=int(vmem_limit),
        ),
    )(x2d, w1p, b1p, w2p, b2p)


def _call_hidden_tiled(x2d, w1p, b1p, w2p, b2p, *, tm, th, out_dtype, vmem_limit):
    M_pad, dim_p = x2d.shape
    hid_p = w1p.shape[1]
    out_p = w2p.shape[1]

    return pl.pallas_call(
        ffn_hidden_tiled_kernel,
        out_shape=jax.ShapeDtypeStruct((M_pad, out_p), out_dtype),
        grid_spec=pltpu.PrefetchScalarGridSpec(
            num_scalar_prefetch=0,
            grid=(M_pad // tm, hid_p // th),
            in_specs=[
                pl.BlockSpec((tm, dim_p), lambda i, j: (i, 0)),   # x row tile (resident over j)
                pl.BlockSpec((dim_p, th), lambda i, j: (0, j)),   # w1 hidden slab
                pl.BlockSpec((1, th), lambda i, j: (0, j)),       # b1 hidden slab
                pl.BlockSpec((th, out_p), lambda i, j: (j, 0)),   # w2 hidden slab
                pl.BlockSpec((1, out_p), lambda i, j: (0, 0)),    # b2 (small, constant)
            ],
            out_specs=pl.BlockSpec((tm, out_p), lambda i, j: (i, 0)),
            scratch_shapes=[pltpu.VMEM((tm, out_p), jnp.float32)],
        ),
        compiler_params=pltpu.CompilerParams(
            dimension_semantics=("parallel", "arbitrary"),
            vmem_limit_bytes=int(vmem_limit),
        ),
    )(x2d, w1p, b1p, w2p, b2p)


def feedforward_pallas(x, params, *, tm=None, th=1024, out_dtype=None,
                       force_hidden_tiling=False):
    """x: (B, S, dim). params: raw {"w1","b1","w2","b2"} or output of prepare_params()."""
    params = prepare_params(params)
    w1p, b1p, w2p, b2p = params["w1"], params["b1"], params["w2"], params["b2"]
    dim, out_dim = params["dim"], params["out_dim"]
    dim_p, hid_p = w1p.shape
    out_p = w2p.shape[1]

    B, S, _ = x.shape
    M = B * S
    x2d = x.reshape(M, dim)
    if dim_p != dim:
        x2d = jnp.pad(x2d, ((0, 0), (0, dim_p - dim)))

    out_dtype = x.dtype if out_dtype is None else out_dtype
    out_bytes = jnp.dtype(out_dtype).itemsize
    x_bytes = x2d.dtype.itemsize

    # --- Row tiling (multiple of 16; adaptive to limit last-tile waste).
    tm_eff = _choose_tm(M) if tm is None else min(_round_up(tm, 16), _round_up(M, 16))
    M_pad = _round_up(M, tm_eff)
    if M_pad != M:
        x2d = jnp.pad(x2d, ((0, M_pad - M), (0, 0)))

    vmem_cap = _vmem_cap_bytes()

    # --- Fully-resident-path footprint (weights single-buffered, x/out double-buffered,
    #     plus live intermediates: bf16 x copy, f32 + bf16 hidden, f32 output before cast).
    weight_bytes = dim_p * hid_p * 2 + hid_p * out_p * 2 + hid_p * 4 + out_p * 4
    tile_bytes = 2 * (tm_eff * dim_p * x_bytes + tm_eff * out_p * out_bytes)
    inter_bytes = (tm_eff * dim_p * 2 + tm_eff * hid_p * 4 + tm_eff * hid_p * 2
                   + tm_eff * out_p * 4)
    resident_budget = weight_bytes + tile_bytes + inter_bytes

    if (not force_hidden_tiling) and resident_budget + (2 << 20) <= vmem_cap:
        vmem_limit = min(max(resident_budget + (4 << 20), 32 << 20), vmem_cap)
        try:
            out = _call_resident(x2d, w1p, b1p, w2p, b2p, tm=tm_eff,
                                 out_dtype=out_dtype, vmem_limit=vmem_limit,
                                 single_buffer=True)
        except Exception:
            # pipeline_mode=pl.Buffered(1) unsupported on this jax build -> default buffering.
            out = _call_resident(x2d, w1p, b1p, w2p, b2p, tm=tm_eff,
                                 out_dtype=out_dtype, vmem_limit=vmem_limit,
                                 single_buffer=False)
    else:
        # --- Hidden-tiled fallback: bound per-step VMEM; shrink th (multiple of 128 that
        #     divides hid_p) until the per-step footprint fits under the cap.
        def ht_budget(t):
            return (2 * (tm_eff * dim_p * x_bytes + dim_p * t * 2 + t * 4 + t * out_p * 2
                         + out_p * 4 + tm_eff * out_p * out_bytes)
                    + tm_eff * out_p * 4                    # f32 accumulator scratch
                    + tm_eff * dim_p * 2                    # bf16 x copy
                    + tm_eff * t * 4 + tm_eff * t * 2)      # f32 + bf16 hidden slab

        th_eff = min(_round_up(th, 128), hid_p)
        while th_eff > 128 and (hid_p % th_eff != 0
                                or ht_budget(th_eff) + (2 << 20) > vmem_cap):
            th_eff -= 128
        vmem_limit = min(max(ht_budget(th_eff) + (4 << 20), 32 << 20), vmem_cap)
        out = _call_hidden_tiled(x2d, w1p, b1p, w2p, b2p, tm=tm_eff, th=th_eff,
                                 out_dtype=out_dtype, vmem_limit=vmem_limit)

    return out[:M, :out_dim].reshape(B, S, out_dim)


# ---------------------------------------------------------------------------
# Reference + init (PyTorch-matching)
# ---------------------------------------------------------------------------
def init_params(key, dim, hidden_dim):
    """nn.Linear default init: U(-1/sqrt(fan_in), 1/sqrt(fan_in)) for weights and biases."""
    ks = jax.random.split(key, 4)

    def lin(kw, kb, fan_in, fan_out):
        bound = 1.0 / jnp.sqrt(jnp.float32(fan_in))
        w = jax.random.uniform(kw, (fan_in, fan_out), jnp.float32, -bound, bound)
        b = jax.random.uniform(kb, (fan_out,), jnp.float32, -bound, bound)
        return w, b

    w1, b1 = lin(ks[0], ks[1], dim, hidden_dim)
    w2, b2 = lin(ks[2], ks[3], hidden_dim, dim)
    return {"w1": w1, "b1": b1, "w2": w2, "b2": b2}


def feedforward_ref(x, p):
    """Pure-JAX f32 reference matching the PyTorch module (dropout p=0 -> identity)."""
    h = x @ p["w1"] + p["b1"]
    h = 0.5 * h * (1.0 + lax.erf(h / jnp.sqrt(2.0)))
    return h @ p["w2"] + p["b2"]


if __name__ == "__main__":
    key = jax.random.PRNGKey(0)
    kx, kp, kx2, kp2 = jax.random.split(key, 4)

    # Small shape exercising the 128-lane padding path (dim 64 -> 128).
    B, S, dim, hidden_dim = 2, 8, 64, 128
    x = jax.random.normal(kx, (B, S, dim), dtype=jnp.float32)
    raw = init_params(kp, dim, hidden_dim)
    prepared = prepare_params(raw)   # pad + bf16-cast weights ONCE, off the hot path

    out = jax.block_until_ready(feedforward_pallas(x, prepared))
    ref = feedforward_ref(x, raw)
    assert out.shape == (B, S, dim)
    # bf16 MXU operands with f32 accumulation -> loose-but-tight-enough tolerance.
    assert jnp.allclose(out, ref, atol=2e-2, rtol=2e-2), "mismatch (resident path)"

    # Multi-step row grid with a 16-row tile (bf16-safe minimum multiple).
    out2 = jax.block_until_ready(feedforward_pallas(x, prepared, tm=16))
    assert jnp.allclose(out2, ref, atol=2e-2, rtol=2e-2), "mismatch (tm=16 path)"

    # Hidden-dimension-tiled fallback path (what v7x would use at ViT-L scale), with a
    # multi-step reduction axis (hidden 256 -> two 128-wide slabs).
    B2, S2, dim2, hidden2 = 2, 24, 64, 256
    x2 = jax.random.normal(kx2, (B2, S2, dim2), dtype=jnp.float32)
    raw2 = init_params(kp2, dim2, hidden2)
    out3 = jax.block_until_ready(
        feedforward_pallas(x2, raw2, th=128, force_hidden_tiling=True))
    ref3 = feedforward_ref(x2, raw2)
    assert out3.shape == (B2, S2, dim2)
    assert jnp.allclose(out3, ref3, atol=2e-2, rtol=2e-2), "mismatch (hidden-tiled path)"

    # Optional bf16 output (halves vst + HBM writeback when the next layer accepts bf16).
    out4 = jax.block_until_ready(feedforward_pallas(x, prepared, out_dtype=jnp.bfloat16))
    assert out4.dtype == jnp.bfloat16
    assert jnp.allclose(out4.astype(jnp.float32), ref, atol=5e-2, rtol=5e-2), \
        "mismatch (bf16 output)"

    print("KERNEL_OK")
</pallas_src>

<mosaic_0001>
module attributes {stable_mosaic.version = 11 : i64} {
  func.func @ffn_resident_kernel(%arg0: i32, %arg1: memref<16x128xf32, #tpu.memory_space<vmem>>, %arg2: memref<128x128xbf16, #tpu.memory_space<vmem>>, %arg3: memref<1x128xf32, #tpu.memory_space<vmem>>, %arg4: memref<128x128xbf16, #tpu.memory_space<vmem>>, %arg5: memref<1x128xf32, #tpu.memory_space<vmem>>, %arg6: memref<16x128xf32, #tpu.memory_space<vmem>>) attributes {dimension_semantics = [#tpu.dimension_semantics<parallel>], iteration_bounds = array<i64: 1>, scalar_prefetch = 0 : i64, scratch_operands = 0 : i64, tpu.core_type = #tpu.core_type<tc>, window_params = [{transform_indices = @transform_0, window_bounds = array<i64: 16, 128>}, {pipeline_mode = #tpu.pipeline_mode<synchronous>, transform_indices = @transform_1, window_bounds = array<i64: 128, 128>}, {pipeline_mode = #tpu.pipeline_mode<synchronous>, transform_indices = @transform_2, window_bounds = array<i64: 1, 128>}, {pipeline_mode = #tpu.pipeline_mode<synchronous>, transform_indices = @transform_3, window_bounds = array<i64: 128, 128>}, {pipeline_mode = #tpu.pipeline_mode<synchronous>, transform_indices = @transform_4, window_bounds = array<i64: 1, 128>}, {transform_indices = @transform_5, window_bounds = array<i64: 16, 128>}]} {
    %c0 = arith.constant 0 : index
    %c0_0 = arith.constant 0 : index
    %0 = vector.load %arg1[%c0, %c0_0] : memref<16x128xf32, #tpu.memory_space<vmem>>, vector<16x128xf32>
    %1 = arith.truncf %0 : vector<16x128xf32> to vector<16x128xbf16>
    %c0_1 = arith.constant 0 : index
    %c0_2 = arith.constant 0 : index
    %2 = vector.load %arg2[%c0_1, %c0_2] : memref<128x128xbf16, #tpu.memory_space<vmem>>, vector<128x128xbf16>
    %cst = arith.constant dense<0.000000e+00> : vector<16x128xf32>
    %3 = tpu.matmul %1, %2, %cst {dimension_numbers = #tpu.dot_dimension_numbers<[1], [0], [0], [1], [0, 0, 1, 1], [], []>} : vector<16x128xbf16>, vector<128x128xbf16>, vector<16x128xf32> -> vector<16x128xf32>
    %c0_3 = arith.constant 0 : index
    %c0_4 = arith.constant 0 : index
    %4 = vector.load %arg3[%c0_3, %c0_4] : memref<1x128xf32, #tpu.memory_space<vmem>>, vector<1x128xf32>
    %5 = vector.broadcast %4 : vector<1x128xf32> to vector<16x128xf32>
    %6 = arith.addf %3, %5 : vector<16x128xf32>
    %cst_5 = arith.constant 5.000000e-01 : f32
    %7 = vector.broadcast %cst_5 : f32 to vector<16x128xf32>
    %8 = arith.mulf %7, %6 : vector<16x128xf32>
    %cst_6 = arith.constant 0.707106769 : f32
    %9 = vector.broadcast %cst_6 : f32 to vector<16x128xf32>
    %10 = arith.mulf %6, %9 : vector<16x128xf32>
    %11 = math.erf %10 : vector<16x128xf32>
    %cst_7 = arith.constant 1.000000e+00 : f32
    %12 = vector.broadcast %cst_7 : f32 to vector<16x128xf32>
    %13 = arith.addf %12, %11 : vector<16x128xf32>
    %14 = arith.mulf %8, %13 : vector<16x128xf32>
    %15 = arith.truncf %14 : vector<16x128xf32> to vector<16x128xbf16>
    %c0_8 = arith.constant 0 : index
    %c0_9 = arith.constant 0 : index
    %16 = vector.load %arg4[%c0_8, %c0_9] : memref<128x128xbf16, #tpu.memory_space<vmem>>, vector<128x128xbf16>
    %cst_10 = arith.constant dense<0.000000e+00> : vector<16x128xf32>
    %17 = tpu.matmul %15, %16, %cst_10 {dimension_numbers = #tpu.dot_dimension_numbers<[1], [0], [0], [1], [0, 0, 1, 1], [], []>} : vector<16x128xbf16>, vector<128x128xbf16>, vector<16x128xf32> -> vector<16x128xf32>
    %c0_11 = arith.constant 0 : index
    %c0_12 = arith.constant 0 : index
    %18 = vector.load %arg5[%c0_11, %c0_12] : memref<1x128xf32, #tpu.memory_space<vmem>>, vector<1x128xf32>
    %19 = vector.broadcast %18 : vector<1x128xf32> to vector<16x128xf32>
    %20 = arith.addf %17, %19 : vector<16x128xf32>
    %c0_13 = arith.constant 0 : index
    %c0_14 = arith.constant 0 : index
    %21 = vector.load %arg6[%c0_13, %c0_14] : memref<16x128xf32, #tpu.memory_space<vmem>>, vector<16x128xf32>
    tpu.vector_store %arg6[%c0_13, %c0_14], %20 {strides = array<i32>} : memref<16x128xf32, #tpu.memory_space<vmem>>, vector<16x128xf32>,
    return
  }
  func.func @transform_0(%arg0: i32) -> (i32, i32) {
    %c0_i32 = arith.constant 0 : i32
    %c0_i32_0 = arith.constant 0 : i32
    return %arg0, %c0_i32 : i32, i32
  }
  func.func @transform_1(%arg0: i32) -> (i32, i32) {
    %c0_i32 = arith.constant 0 : i32
    %c0_i32_0 = arith.constant 0 : i32
    %c0_i32_1 = arith.constant 0 : i32
    return %c0_i32, %c0_i32_0 : i32, i32
  }
  func.func @transform_2(%arg0: i32) -> (i32, i32) {
    %c0_i32 = arith.constant 0 : i32
    %c0_i32_0 = arith.constant 0 : i32
    %c0_i32_1 = arith.constant 0 : i32
    return %c0_i32, %c0_i32_0 : i32, i32
  }
  func.func @transform_3(%arg0: i32) -> (i32, i32) {
    %c0_i32 = arith.constant 0 : i32
    %c0_i32_0 = arith.constant 0 : i32
    %c0_i32_1 = arith.constant 0 : i32
    return %c0_i32, %c0_i32_0 : i32, i32
  }
  func.func @transform_4(%arg0: i32) -> (i32, i32) {
    %c0_i32 = arith.constant 0 : i32
    %c0_i32_0 = arith.constant 0 : i32
    %c0_i32_1 = arith.constant 0 : i32
    return %c0_i32, %c0_i32_0 : i32, i32
  }
  func.func @transform_5(%arg0: i32) -> (i32, i32) {
    %c0_i32 = arith.constant 0 : i32
    %c0_i32_0 = arith.constant 0 : i32
    return %arg0, %c0_i32 : i32, i32
  }
}

module attributes {stable_mosaic.version = 11 : i64} {
  func.func @ffn_resident_kernel(%arg0: i32, %arg1: memref<16x128xf32, #tpu.memory_space<vmem>>, %arg2: memref<128x128xbf16, #tpu.memory_space<vmem>>, %arg3: memref<1x128xf32, #tpu.memory_space<vmem>>, %arg4: memref<128x128xbf16, #tpu.memory_space<vmem>>, %arg5: memref<1x128xf32, #tpu.memory_space<vmem>>, %arg6: memref<16x128xf32, #tpu.memory_space<vmem>>) attributes {dimension_semantics = [#tpu.dimension_semantics<parallel>], iteration_bounds = array<i64: 1>, scalar_prefetch = 0 : i64, scratch_operands = 0 : i64, tpu.core_type = #tpu.core_type<tc>, window_params = [{transform_indices = @transform_0, window_bounds = array<i64: 16, 128>}, {pipeline_mode = #tpu.pipeline_mode<synchronous>, transform_indices = @transform_1, window_bounds = array<i64: 128, 128>}, {pipeline_mode = #tpu.pipeline_mode<synchronous>, transform_indices = @transform_2, window_bounds = array<i64: 1, 128>}, {pipeline_mode = #tpu.pipeline_mode<synchronous>, transform_indices = @transform_3, window_bounds = array<i64: 128, 128>}, {pipeline_mode = #tpu.pipeline_mode<synchronous>, transform_indices = @transform_4, window_bounds = array<i64: 1, 128>}, {transform_indices = @transform_5, window_bounds = array<i64: 16, 128>}]} {
    %c0 = arith.constant 0 : index
    %c0_0 = arith.constant 0 : index
    %0 = vector.load %arg1[%c0, %c0_0] : memref<16x128xf32, #tpu.memory_space<vmem>>, vector<16x128xf32>
    %1 = arith.truncf %0 : vector<16x128xf32> to vector<16x128xbf16>
    %c0_1 = arith.constant 0 : index
    %c0_2 = arith.constant 0 : index
    %2 = vector.load %arg2[%c0_1, %c0_2] : memref<128x128xbf16, #tpu.memory_space<vmem>>, vector<128x128xbf16>
    %cst = arith.constant dense<0.000000e+00> : vector<16x128xf32>
    %3 = tpu.matmul %1, %2, %cst {dimension_numbers = #tpu.dot_dimension_numbers<[1], [0], [0], [1], [0, 0, 1, 1], [], []>} : vector<16x128xbf16>, vector<128x128xbf16>, vector<16x128xf32> -> vector<16x128xf32>
    %c0_3 = arith.constant 0 : index
    %c0_4 = arith.constant 0 : index
    %4 = vector.load %arg3[%c0_3, %c0_4] : memref<1x128xf32, #tpu.memory_space<vmem>>, vector<1x128xf32>
    %5 = vector.broadcast %4 : vector<1x128xf32> to vector<16x128xf32>
    %6 = arith.addf %3, %5 : vector<16x128xf32>
    %cst_5 = arith.constant 5.000000e-01 : f32
    %7 = vector.broadcast %cst_5 : f32 to vector<16x128xf32>
    %8 = arith.mulf %7, %6 : vector<16x128xf32>
    %cst_6 = arith.constant 0.707106769 : f32
    %9 = vector.broadcast %cst_6 : f32 to vector<16x128xf32>
    %10 = arith.mulf %6, %9 : vector<16x128xf32>
    %11 = math.erf %10 : vector<16x128xf32>
    %cst_7 = arith.constant 1.000000e+00 : f32
    %12 = vector.broadcast %cst_7 : f32 to vector<16x128xf32>
    %13 = arith.addf %12, %11 : vector<16x128xf32>
    %14 = arith.mulf %8, %13 : vector<16x128xf32>
    %15 = arith.truncf %14 : vector<16x128xf32> to vector<16x128xbf16>
    %c0_8 = arith.constant 0 : index
    %c0_9 = arith.constant 0 : index
    %16 = vector.load %arg4[%c0_8, %c0_9] : memref<128x128xbf16, #tpu.memory_space<vmem>>, vector<128x128xbf16>
    %cst_10 = arith.constant dense<0.000000e+00> : vector<16x128xf32>
    %17 = tpu.matmul %15, %16, %cst_10 {dimension_numbers = #tpu.dot_dimension_numbers<[1], [0], [0], [1], [0, 0, 1, 1], [], []>} : vector<16x128xbf16>, vector<128x128xbf16>, vector<16x128xf32> -> vector<16x128xf32>
    %c0_11 = arith.constant 0 : index
    %c0_12 = arith.constant 0 : index
    %18 = vector.load %arg5[%c0_11, %c0_12] : memref<1x128xf32, #tpu.memory_space<vmem>>, vector<1x128xf32>
    %19 = vector.broadcast %18 : vector<1x128xf32> to vector<16x128xf32>
    %20 = arith.addf %17, %19 : vector<16x128xf32>
    %c0_13 = arith.constant 0 : index
    %c0_14 = arith.constant 0 : index
    %21 = vector.load %arg6[%c0_13, %c0_14] : memref<16x128xf32, #tpu.memory_space<vmem>>, vector<16x128xf32>
    tpu.vector_store %arg6[%c0_13, %c0_14], %20 {strides = array<i32>} : memref<16x128xf32, #tpu.memory_space<vmem>>, vector<16x128xf32>,
    return
  }
  func.func @transform_0(%arg0: i32) -> (i32, i32) {
    %c0_i32 = arith.constant 0 : i32
    %c0_i32_0 = arith.constant 0 : i32
    return %arg0, %c0_i32 : i32, i32
  }
  func.func @transform_1(%arg0: i32) -> (i32, i32) {
    %c0_i32 = arith.constant 0 : i32
    %c0_i32_0 = arith.constant 0 : i32
    %c0_i32_1 = arith.constant 0 : i32
    return %c0_i32, %c0_i32_0 : i32, i32
  }
  func.func @transform_2(%arg0: i32) -> (i32, i32) {
    %c0_i32 = arith.constant 0 : i32
    %c0_i32_0 = arith.constant 0 : i32
    %c0_i32_1 = arith.constant 0 : i32
    return %c0_i32, %c0_i32_0 : i32, i32
  }
  func.func @transform_3(%arg0: i32) -> (i32, i32) {
    %c0_i32 = arith.constant 0 : i32
    %c0_i32_0 = arith.constant 0 : i32
    %c0_i32_1 = arith.constant 0 : i32
    return %c0_i32, %c0_i32_0 : i32, i32
  }
  func.func @transform_4(%arg0: i32) -> (i32, i32) {
    %c0_i32 = arith.constant 0 : i32
    %c0_i32_0 = arith.constant 0 : i32
    %c0_i32_1 = arith.constant 0 : i32
    return %c0_i32, %c0_i32_0 : i32, i32
  }
  func.func @transform_5(%arg0: i32) -> (i32, i32) {
    %c0_i32 = arith.constant 0 : i32
    %c0_i32_0 = arith.constant 0 : i32
    return %arg0, %c0_i32 : i32, i32
  }
}

</mosaic_0001>

<llo_original>
// kernel: tpu_custom_call.1
$region0: #{tpu_custom_call.1}
  #allocation0 [shape = 'u32[]', space=smem, size = 0x4, offset = 0x4, fixed_abs, tag = 'smem constant byte address 0x4 - core index']
  #allocation1 [shape = 'u32[144,128]{1,0:T(1,128)}', space=vmem, size = 0x12000, scoped, tag = 'internal scratch']
  %s0 = inlined_call_operand.hbm [shape: f32[16,128], index: 0, kind: input, shape index: {}]
  %s1 = inlined_call_operand.hbm [shape: bf16[128,128], index: 1, kind: input, shape index: {}]
  %s2 = inlined_call_operand.vmem [shape: f32[1,128], index: 2, kind: input, shape index: {}]
  %s3 = inlined_call_operand.hbm [shape: bf16[128,128], index: 3, kind: input, shape index: {}]
  %s4 = inlined_call_operand.vmem [shape: f32[1,128], index: 4, kind: input, shape index: {}]
  %s5 = inlined_call_operand.hbm [shape: f32[16,128], index: 5, kind: output, shape index: {}]
  %s6 = sld [smem:[#allocation0]]
  $region42: #{tpu_custom_call.1} parent=0
    _
  %s8 = ssub.s32 1, %s6
  %s9 = scalar_select 0, %s8, %s6
  $region1: #{tpu_custom_call.1} parent=0
    #allocation2 [shape = 'u8[8192]{0}', space=vmem, size = 0x2000, scoped, tag = 'input window, operand 0, single buffered']
    #allocation3 [shape = 's32[1]{0}', space=sflag, size = 0x4, scoped, tag = 'scoped memory for tpu_custom_call.1']
    #allocation4 [shape = 's32[1]{0}', space=sflag, size = 0x4, scoped, tag = 'scoped memory for tpu_custom_call.1']
    #allocation5 [shape = 'u8[32768]{0}', space=vmem, size = 0x8000, scoped, tag = 'input window, operand 1, single buffered']
    #allocation6 [shape = 's32[1]{0}', space=sflag, size = 0x4, scoped, tag = 'scoped memory for tpu_custom_call.1']
    #allocation7 [shape = 'u8[32768]{0}', space=vmem, size = 0x8000, scoped, tag = 'input window, operand 3, single buffered']
    #allocation8 [shape = 'u8[8192]{0}', space=vmem, size = 0x2000, scoped, tag = 'output window, operand 0, single buffered']
    %10 = vsyncpa [#allocation3], 0
    %11 = vsyncpa [#allocation6], 0
    %12 = vsyncpa [#allocation4], 0
    // Predicated region
    $region2: #{tpu_custom_call.1} parent=1 // pred_check
      _
    $region3: #{tpu_custom_call.1} parent=1 // pred_check_branch
      %14 = sbr.rel (0) target = $region5
    $region4: #{tpu_custom_call.1} parent=1 // pred_region
      %s16 = ssub.s32 256, 256
      %17 = vsyncadd [#allocation3], %s16
      %s18 = sshll.u32 [#allocation2], 4
      %s19 = int_to_ptr.vmem [resolvable:$true] %s18
      %24 = dma.hbm_to_vmem [thread:$0]  %s0, 256, %s19, [#allocation3], 128, 128, 8
    $region5: #{tpu_custom_call.1} parent=1 // pred_fallthru
      _
    // Predicated region
    $region6: #{tpu_custom_call.1} parent=1 // pred_check
      _
    $region7: #{tpu_custom_call.1} parent=1 // pred_check_branch
      %26 = sbr.rel (0) target = $region9
    $region8: #{tpu_custom_call.1} parent=1 // pred_region
      %s28 = ssub.s32 1024, 1024
      %29 = vsyncadd [#allocation6], %s28
      %s30 = sshll.u32 [#allocation5], 4
      %s31 = int_to_ptr.vmem [resolvable:$true] %s30
      %36 = dma.hbm_to_vmem [thread:$0]  %s1, 1024, %s31, [#allocation6], 64, 64, 4
    $region9: #{tpu_custom_call.1} parent=1 // pred_fallthru
      _
    // Predicated region
    $region10: #{tpu_custom_call.1} parent=1 // pred_check
      _
    $region11: #{tpu_custom_call.1} parent=1 // pred_check_branch
      %38 = sbr.rel (0) target = $region13
    $region12: #{tpu_custom_call.1} parent=1 // pred_region
      _
    $region13: #{tpu_custom_call.1} parent=1 // pred_fallthru
      _
    // Predicated region
    $region14: #{tpu_custom_call.1} parent=1 // pred_check
      _
    $region15: #{tpu_custom_call.1} parent=1 // pred_check_branch
      %40 = sbr.rel (0) target = $region17
    $region16: #{tpu_custom_call.1} parent=1 // pred_region
      %s42 = ssub.s32 1024, 1024
      %43 = vsyncadd [#allocation6], %s42
      %s44 = sshll.u32 [#allocation7], 4
      %s45 = int_to_ptr.vmem [resolvable:$true] %s44
      %50 = dma.hbm_to_vmem [thread:$0]  %s3, 1024, %s45, [#allocation6], 64, 64, 4
    $region17: #{tpu_custom_call.1} parent=1 // pred_fallthru
      _
    // Predicated region
    $region18: #{tpu_custom_call.1} parent=1 // pred_check
      _
    $region19: #{tpu_custom_call.1} parent=1 // pred_check_branch
      %52 = sbr.rel (0) target = $region21
    $region20: #{tpu_custom_call.1} parent=1 // pred_region
      _
    $region21: #{tpu_custom_call.1} parent=1 // pred_fallthru
      _
    // Predicated region
    $region22: #{tpu_custom_call.1} parent=1 // pred_check
      _
    $region23: #{tpu_custom_call.1} parent=1 // pred_check_branch
      %54 = sbr.rel (0) target = $region25
    $region24: #{tpu_custom_call.1} parent=1 // pred_region
      %55 = dma.done [#allocation3], 256
    $region25: #{tpu_custom_call.1} parent=1 // pred_fallthru
      _
    // Predicated region
    $region26: #{tpu_custom_call.1} parent=1 // pred_check
      _
    $region27: #{tpu_custom_call.1} parent=1 // pred_check_branch
      %57 = sbr.rel (0) target = $region29
    $region28: #{tpu_custom_call.1} parent=1 // pred_region
      %58 = dma.done [#allocation6], 1024
    $region29: #{tpu_custom_call.1} parent=1 // pred_fallthru
      _
    // Predicated region
    $region30: #{tpu_custom_call.1} parent=1 // pred_check
      _
    $region31: #{tpu_custom_call.1} parent=1 // pred_check_branch
      %60 = sbr.rel (0) target = $region33
    $region32: #{tpu_custom_call.1} parent=1 // pred_region
      %61 = dma.done [#allocation6], 1024
    $region33: #{tpu_custom_call.1} parent=1 // pred_fallthru
      _
    %v63 = vld [vmem:[#allocation2] sm:$0xff]
    %v64 = vld [vmem:[#allocation2 + $0x8] sm:$0xff]
    %v65 = vpack.c.bf16 %v64, %v63
    %v66 = vld [vmem:[#allocation5] sm:$0xf]
    %v67 = vld [vmem:[#allocation5 + $0x4] sm:$0xf]
    %v68 = vld [vmem:[#allocation5 + $0x8] sm:$0xf]
    %v69 = vld [vmem:[#allocation5 + $0xc] sm:$0xf]
    %v70 = vld [vmem:[#allocation5 + $0x10] sm:$0xf]
    %v71 = vld [vmem:[#allocation5 + $0x14] sm:$0xf]
    %v72 = vld [vmem:[#allocation5 + $0x18] sm:$0xf]
    %v73 = vld [vmem:[#allocation5 + $0x1c] sm:$0xf]
    %v74 = vld [vmem:[#allocation5 + $0x20] sm:$0xf]
    %v75 = vld [vmem:[#allocation5 + $0x24] sm:$0xf]
    %v76 = vld [vmem:[#allocation5 + $0x28] sm:$0xf]
    %v77 = vld [vmem:[#allocation5 + $0x2c] sm:$0xf]
    %v78 = vld [vmem:[#allocation5 + $0x30] sm:$0xf]
    %v79 = vld [vmem:[#allocation5 + $0x34] sm:$0xf]
    %v80 = vld [vmem:[#allocation5 + $0x38] sm:$0xf]
    %v81 = vld [vmem:[#allocation5 + $0x3c] sm:$0xf]
    %v82 = vld [vmem:[%s2] sm:$0x1]
    %v84 = vlaneseq
    %v85 = vshrl.u32 %v84, 7
    %v86 = vsub.s32 0, %v85
    %v87 = vrot.slane %v82, %v86
    %v105 = vunpack.c.l.b16 %v66
    %v106 = vunpack.c.l.b16 %v67
    %v107 = vunpack.c.l.b16 %v68
    %v108 = vunpack.c.l.b16 %v69
    %v109 = vunpack.c.l.b16 %v70
    %v110 = vunpack.c.l.b16 %v71
    %v111 = vunpack.c.l.b16 %v72
    %v112 = vunpack.c.l.b16 %v73
    %v113 = vunpack.c.l.b16 %v74
    %v114 = vunpack.c.l.b16 %v75
    %v115 = vunpack.c.l.b16 %v76
    %v116 = vunpack.c.l.b16 %v77
    %v117 = vunpack.c.l.b16 %v78
    %v118 = vunpack.c.l.b16 %v79
    %v119 = vunpack.c.l.b16 %v80
    %v120 = vunpack.c.l.b16 %v81
    %v121 = vpack.c.b16 %v106, %v105
    %v122 = vpack.c.b16 %v108, %v107
    %v123 = vpack.c.b16 %v110, %v109
    %v124 = vpack.c.b16 %v112, %v111
    %v125 = vpack.c.b16 %v114, %v113
    %v126 = vpack.c.b16 %v116, %v115
    %v127 = vpack.c.b16 %v118, %v117
    %v128 = vpack.c.b16 %v120, %v119
    %137 = vmatprep.subr.bf16.mxu0 0
    %138 = vmatpush1.bf16.msra.mxu0 %v128
    %139 = vmatprep.subr.bf16.mxu0 0
    %140 = vmatpush1.bf16.msra.mxu0 %v127
    %141 = vmatprep.subr.bf16.mxu0 0
    %142 = vmatpush1.bf16.msra.mxu0 %v126
    %143 = vmatprep.subr.bf16.mxu0 0
    %144 = vmatpush1.bf16.msra.mxu0 %v125
    %145 = vmatprep.subr.bf16.mxu0 0
    %146 = vmatpush1.bf16.msra.mxu0 %v124
    %147 = vmatprep.subr.bf16.mxu0 0
    %148 = vmatpush1.bf16.msra.mxu0 %v123
    %149 = vmatprep.subr.bf16.mxu0 0
    %150 = vmatpush1.bf16.msra.mxu0 %v122
    %151 = vmatprep.subr.bf16.mxu0 0
    %152 = vmatpush1.bf16.msra.mxu0 %v121
    %153 = vmatprep.subr.bf16.mxu0 0
    %154 = vmatpush2.bf16.msra.mxu0 0
    %155 = vmatprep.subr.bf16.mxu0 0
    %156 = vmatpush2.bf16.msra.mxu0 0
    %157 = vmatprep.subr.bf16.mxu0 0
    %158 = vmatpush2.bf16.msra.mxu0 0
    %159 = vmatprep.subr.bf16.mxu0 0
    %160 = vmatpush2.bf16.msra.mxu0 0
    %161 = vmatprep.subr.bf16.mxu0 0
    %162 = vmatpush2.bf16.msra.mxu0 0
    %163 = vmatprep.subr.bf16.mxu0 0
    %164 = vmatpush2.bf16.msra.mxu0 0
    %165 = vmatprep.subr.bf16.mxu0 0
    %166 = vmatpush2.bf16.msra.mxu0 0
    %167 = vmatprep.subr.bf16.mxu0 0
    %168 = vmatpush2.bf16.msra.mxu0 0
    %169 = vmatprep.mubr.bf16.mxu0 0
    %170 = vmatmul.mubr.bf16.gmra.mxu0 %v65
    %v171 = vpop.f32.mrf.mxu0
    %v172 = vadd.f32 %v87, %v171
    %v173 = vpop.f32.mrf.mxu0
    %v174 = vpop.f32.mrf.mxu0
    %v175 = vadd.f32 %v87, %v174
    %v176 = vpop.f32.mrf.mxu0
    %177 = vdwg.mxu0
    %v178 = vmul.f32 %v172, 0.5
    %v179 = vmul.f32 %v175, 0.5
    %v180 = vmul.f32 %v172, 0.70710677
    %v181 = vmul.f32 %v175, 0.70710677
    %v182 = verf.f32.pop %v180
    %v183 = verf.f32.pop %v181
    %v184 = vadd.f32 %v182, 1.0
    %v185 = vadd.f32 %v183, 1.0
    %v186 = vmul.f32 %v178, %v184
    %v187 = vmul.f32 %v179, %v185
    %v188 = vpack.c.bf16 %v187, %v186
    %v189 = vld [vmem:[#allocation7] sm:$0xf]
    %v190 = vld [vmem:[#allocation7 + $0x4] sm:$0xf]
    %v191 = vld [vmem:[#allocation7 + $0x8] sm:$0xf]
    %v192 = vld [vmem:[#allocation7 + $0xc] sm:$0xf]
    %v193 = vld [vmem:[#allocation7 + $0x10] sm:$0xf]
    %v194 = vld [vmem:[#allocation7 + $0x14] sm:$0xf]
    %v195 = vld [vmem:[#allocation7 + $0x18] sm:$0xf]
    %v196 = vld [vmem:[#allocation7 + $0x1c] sm:$0xf]
    %v197 = vld [vmem:[#allocation7 + $0x20] sm:$0xf]
    %v198 = vld [vmem:[#allocation7 + $0x24] sm:$0xf]
    %v199 = vld [vmem:[#allocation7 + $0x28] sm:$0xf]
    %v200 = vld [vmem:[#allocation7 + $0x2c] sm:$0xf]
    %v201 = vld [vmem:[#allocation7 + $0x30] sm:$0xf]
    %v202 = vld [vmem:[#allocation7 + $0x34] sm:$0xf]
    %v203 = vld [vmem:[#allocation7 + $0x38] sm:$0xf]
    %v204 = vld [vmem:[#allocation7 + $0x3c] sm:$0xf]
    %v205 = vld [vmem:[%s4] sm:$0x1]
    %v207 = vlaneseq
    %v208 = vshrl.u32 %v207, 7
    %v209 = vsub.s32 0, %v208
    %v210 = vrot.slane %v205, %v209
    %v228 = vunpack.c.l.b16 %v189
    %v229 = vunpack.c.l.b16 %v190
    %v230 = vunpack.c.l.b16 %v191
    %v231 = vunpack.c.l.b16 %v192
    %v232 = vunpack.c.l.b16 %v193
    %v233 = vunpack.c.l.b16 %v194
    %v234 = vunpack.c.l.b16 %v195
    %v235 = vunpack.c.l.b16 %v196
    %v236 = vunpack.c.l.b16 %v197
    %v237 = vunpack.c.l.b16 %v198
    %v238 = vunpack.c.l.b16 %v199
    %v239 = vunpack.c.l.b16 %v200
    %v240 = vunpack.c.l.b16 %v201
    %v241 = vunpack.c.l.b16 %v202
    %v242 = vunpack.c.l.b16 %v203
    %v243 = vunpack.c.l.b16 %v204
    %v244 = vpack.c.b16 %v229, %v228
    %v245 = vpack.c.b16 %v231, %v230
    %v246 = vpack.c.b16 %v233, %v232
    %v247 = vpack.c.b16 %v235, %v234
    %v248 = vpack.c.b16 %v237, %v236
    %v249 = vpack.c.b16 %v239, %v238
    %v250 = vpack.c.b16 %v241, %v240
    %v251 = vpack.c.b16 %v243, %v242
    %260 = vmatprep.subr.bf16.mxu0 0
    %261 = vmatpush1.bf16.msra.mxu0 %v251
    %262 = vmatprep.subr.bf16.mxu0 0
    %263 = vmatpush1.bf16.msra.mxu0 %v250
    %264 = vmatprep.subr.bf16.mxu0 0
    %265 = vmatpush1.bf16.msra.mxu0 %v249
    %266 = vmatprep.subr.bf16.mxu0 0
    %267 = vmatpush1.bf16.msra.mxu0 %v248
    %268 = vmatprep.subr.bf16.mxu0 0
    %269 = vmatpush1.bf16.msra.mxu0 %v247
    %270 = vmatprep.subr.bf16.mxu0 0
    %271 = vmatpush1.bf16.msra.mxu0 %v246
    %272 = vmatprep.subr.bf16.mxu0 0
    %273 = vmatpush1.bf16.msra.mxu0 %v245
    %274 = vmatprep.subr.bf16.mxu0 0
    %275 = vmatpush1.bf16.msra.mxu0 %v244
    %276 = vmatprep.subr.bf16.mxu0 0
    %277 = vmatpush2.bf16.msra.mxu0 0
    %278 = vmatprep.subr.bf16.mxu0 0
    %279 = vmatpush2.bf16.msra.mxu0 0
    %280 = vmatprep.subr.bf16.mxu0 0
    %281 = vmatpush2.bf16.msra.mxu0 0
    %282 = vmatprep.subr.bf16.mxu0 0
    %283 = vmatpush2.bf16.msra.mxu0 0
    %284 = vmatprep.subr.bf16.mxu0 0
    %285 = vmatpush2.bf16.msra.mxu0 0
    %286 = vmatprep.subr.bf16.mxu0 0
    %287 = vmatpush2.bf16.msra.mxu0 0
    %288 = vmatprep.subr.bf16.mxu0 0
    %289 = vmatpush2.bf16.msra.mxu0 0
    %290 = vmatprep.subr.bf16.mxu0 0
    %291 = vmatpush2.bf16.msra.mxu0 0
    %292 = vmatprep.mubr.bf16.mxu0 0
    %293 = vmatmul.mubr.bf16.gmra.mxu0 %v188
    %v294 = vpop.f32.mrf.mxu0
    %v295 = vadd.f32 %v210, %v294
    %v296 = vpop.f32.mrf.mxu0
    %v297 = vpop.f32.mrf.mxu0
    %v298 = vadd.f32 %v210, %v297
    %v299 = vpop.f32.mrf.mxu0
    %300 = vdwg.mxu0
    %301 = vst [vmem:[#allocation8] sm:$0xff] %v295
    %302 = vst [vmem:[#allocation8 + $0x8] sm:$0xff] %v298
    // Predicated region
    $region34: #{tpu_custom_call.1} parent=1 // pred_check
      _
    $region35: #{tpu_custom_call.1} parent=1 // pred_check_branch
      %304 = sbr.rel (0) target = $region37
    $region36: #{tpu_custom_call.1} parent=1 // pred_region
      %s306 = ssub.s32 256, 256
      %307 = vsyncadd [#allocation4], %s306
      %s308 = sshll.u32 [#allocation8], 4
      %s309 = int_to_ptr.vmem [resolvable:$true] %s308
      %314 = dma.vmem_to_hbm [thread:$0]  %s309, 256, %s5, [#allocation4], 128, 128, 8
    $region37: #{tpu_custom_call.1} parent=1 // pred_fallthru
      _
    // Predicated region
    $region38: #{tpu_custom_call.1} parent=1 // pred_check
      _
    $region39: #{tpu_custom_call.1} parent=1 // pred_check_branch
      %316 = sbr.rel (0) target = $region41
    $region40: #{tpu_custom_call.1} parent=1 // pred_region
      %317 = dma.done [#allocation4], 256
    $region41: #{tpu_custom_call.1} parent=1 // pred_fallthru
      _
    %318 = vsyncpa [#allocation3], 1
    %319 = vsyncpa [#allocation6], 1
    %320 = vsyncpa [#allocation4], 1

// kernel: tpu_custom_call.1
$region0: #{tpu_custom_call.1}
  #allocation0 [shape = 'u32[]', space=smem, size = 0x4, offset = 0x4, fixed_abs, tag = 'smem constant byte address 0x4 - core index']
  #allocation1 [shape = 'u32[144,128]{1,0:T(1,128)}', space=vmem, size = 0x12000, scoped, tag = 'internal scratch']
  %s0 = inlined_call_operand.hbm [shape: f32[16,128], index: 0, kind: input, shape index: {}]
  %s1 = inlined_call_operand.hbm [shape: bf16[128,128], index: 1, kind: input, shape index: {}]
  %s2 = inlined_call_operand.vmem [shape: f32[1,128], index: 2, kind: input, shape index: {}]
  %s3 = inlined_call_operand.hbm [shape: bf16[128,128], index: 3, kind: input, shape index: {}]
  %s4 = inlined_call_operand.vmem [shape: f32[1,128], index: 4, kind: input, shape index: {}]
  %s5 = inlined_call_operand.hbm [shape: f32[16,128], index: 5, kind: output, shape index: {}]
  %s6 = sld [smem:[#allocation0]]
  $region42: #{tpu_custom_call.1} parent=0
    _
  %s8 = ssub.s32 1, %s6
  %s9 = scalar_select 0, %s8, %s6
  $region1: #{tpu_custom_call.1} parent=0
    #allocation2 [shape = 'u8[8192]{0}', space=vmem, size = 0x2000, scoped, tag = 'input window, operand 0, single buffered']
    #allocation3 [shape = 's32[1]{0}', space=sflag, size = 0x4, scoped, tag = 'scoped memory for tpu_custom_call.1']
    #allocation4 [shape = 's32[1]{0}', space=sflag, size = 0x4, scoped, tag = 'scoped memory for tpu_custom_call.1']
    #allocation5 [shape = 'u8[32768]{0}', space=vmem, size = 0x8000, scoped, tag = 'input window, operand 1, single buffered']
    #allocation6 [shape = 's32[1]{0}', space=sflag, size = 0x4, scoped, tag = 'scoped memory for tpu_custom_call.1']
    #allocation7 [shape = 'u8[32768]{0}', space=vmem, size = 0x8000, scoped, tag = 'input window, operand 3, single buffered']
    #allocation8 [shape = 'u8[8192]{0}', space=vmem, size = 0x2000, scoped, tag = 'output window, operand 0, single buffered']
    %10 = vsyncpa [#allocation3], 0
    %11 = vsyncpa [#allocation6], 0
    %12 = vsyncpa [#allocation4], 0
    // Predicated region
    $region2: #{tpu_custom_call.1} parent=1 // pred_check
      _
    $region3: #{tpu_custom_call.1} parent=1 // pred_check_branch
      %14 = sbr.rel (0) target = $region5
    $region4: #{tpu_custom_call.1} parent=1 // pred_region
      %s16 = ssub.s32 256, 256
      %17 = vsyncadd [#allocation3], %s16
      %s18 = sshll.u32 [#allocation2], 4
      %s19 = int_to_ptr.vmem [resolvable:$true] %s18
      %24 = dma.hbm_to_vmem [thread:$0]  %s0, 256, %s19, [#allocation3], 128, 128, 8
    $region5: #{tpu_custom_call.1} parent=1 // pred_fallthru
      _
    // Predicated region
    $region6: #{tpu_custom_call.1} parent=1 // pred_check
      _
    $region7: #{tpu_custom_call.1} parent=1 // pred_check_branch
      %26 = sbr.rel (0) target = $region9
    $region8: #{tpu_custom_call.1} parent=1 // pred_region
      %s28 = ssub.s32 1024, 1024
      %29 = vsyncadd [#allocation6], %s28
      %s30 = sshll.u32 [#allocation5], 4
      %s31 = int_to_ptr.vmem [resolvable:$true] %s30
      %36 = dma.hbm_to_vmem [thread:$0]  %s1, 1024, %s31, [#allocation6], 64, 64, 4
    $region9: #{tpu_custom_call.1} parent=1 // pred_fallthru
      _
    // Predicated region
    $region10: #{tpu_custom_call.1} parent=1 // pred_check
      _
    $region11: #{tpu_custom_call.1} parent=1 // pred_check_branch
      %38 = sbr.rel (0) target = $region13
    $region12: #{tpu_custom_call.1} parent=1 // pred_region
      _
    $region13: #{tpu_custom_call.1} parent=1 // pred_fallthru
      _
    // Predicated region
    $region14: #{tpu_custom_call.1} parent=1 // pred_check
      _
    $region15: #{tpu_custom_call.1} parent=1 // pred_check_branch
      %40 = sbr.rel (0) target = $region17
    $region16: #{tpu_custom_call.1} parent=1 // pred_region
      %s42 = ssub.s32 1024, 1024
      %43 = vsyncadd [#allocation6], %s42
      %s44 = sshll.u32 [#allocation7], 4
      %s45 = int_to_ptr.vmem [resolvable:$true] %s44
      %50 = dma.hbm_to_vmem [thread:$0]  %s3, 1024, %s45, [#allocation6], 64, 64, 4
    $region17: #{tpu_custom_call.1} parent=1 // pred_fallthru
      _
    // Predicated region
    $region18: #{tpu_custom_call.1} parent=1 // pred_check
      _
    $region19: #{tpu_custom_call.1} parent=1 // pred_check_branch
      %52 = sbr.rel (0) target = $region21
    $region20: #{tpu_custom_call.1} parent=1 // pred_region
      _
    $region21: #{tpu_custom_call.1} parent=1 // pred_fallthru
      _
    // Predicated region
    $region22: #{tpu_custom_call.1} parent=1 // pred_check
      _
    $region23: #{tpu_custom_call.1} parent=1 // pred_check_branch
      %54 = sbr.rel (0) target = $region25
    $region24: #{tpu_custom_call.1} parent=1 // pred_region
      %55 = dma.done [#allocation3], 256
    $region25: #{tpu_custom_call.1} parent=1 // pred_fallthru
      _
    // Predicated region
    $region26: #{tpu_custom_call.1} parent=1 // pred_check
      _
    $region27: #{tpu_custom_call.1} parent=1 // pred_check_branch
      %57 = sbr.rel (0) target = $region29
    $region28: #{tpu_custom_call.1} parent=1 // pred_region
      %58 = dma.done [#allocation6], 1024
    $region29: #{tpu_custom_call.1} parent=1 // pred_fallthru
      _
    // Predicated region
    $region30: #{tpu_custom_call.1} parent=1 // pred_check
      _
    $region31: #{tpu_custom_call.1} parent=1 // pred_check_branch
      %60 = sbr.rel (0) target = $region33
    $region32: #{tpu_custom_call.1} parent=1 // pred_region
      %61 = dma.done [#allocation6], 1024
    $region33: #{tpu_custom_call.1} parent=1 // pred_fallthru
      _
    %v63 = vld [vmem:[#allocation2] sm:$0xff]
    %v64 = vld [vmem:[#allocation2 + $0x8] sm:$0xff]
    %v65 = vpack.c.bf16 %v64, %v63
    %v66 = vld [vmem:[#allocation5] sm:$0xf]
    %v67 = vld [vmem:[#allocation5 + $0x4] sm:$0xf]
    %v68 = vld [vmem:[#allocation5 + $0x8] sm:$0xf]
    %v69 = vld [vmem:[#allocation5 + $0xc] sm:$0xf]
    %v70 = vld [vmem:[#allocation5 + $0x10] sm:$0xf]
    %v71 = vld [vmem:[#allocation5 + $0x14] sm:$0xf]
    %v72 = vld [vmem:[#allocation5 + $0x18] sm:$0xf]
    %v73 = vld [vmem:[#allocation5 + $0x1c] sm:$0xf]
    %v74 = vld [vmem:[#allocation5 + $0x20] sm:$0xf]
    %v75 = vld [vmem:[#allocation5 + $0x24] sm:$0xf]
    %v76 = vld [vmem:[#allocation5 + $0x28] sm:$0xf]
    %v77 = vld [vmem:[#allocation5 + $0x2c] sm:$0xf]
    %v78 = vld [vmem:[#allocation5 + $0x30] sm:$0xf]
    %v79 = vld [vmem:[#allocation5 + $0x34] sm:$0xf]
    %v80 = vld [vmem:[#allocation5 + $0x38] sm:$0xf]
    %v81 = vld [vmem:[#allocation5 + $0x3c] sm:$0xf]
    %v82 = vld [vmem:[%s2] sm:$0x1]
    %v84 = vlaneseq
    %v85 = vshrl.u32 %v84, 7
    %v86 = vsub.s32 0, %v85
    %v87 = vrot.slane %v82, %v86
    %v105 = vunpack.c.l.b16 %v66
    %v106 = vunpack.c.l.b16 %v67
    %v107 = vunpack.c.l.b16 %v68
    %v108 = vunpack.c.l.b16 %v69
    %v109 = vunpack.c.l.b16 %v70
    %v110 = vunpack.c.l.b16 %v71
    %v111 = vunpack.c.l.b16 %v72
    %v112 = vunpack.c.l.b16 %v73
    %v113 = vunpack.c.l.b16 %v74
    %v114 = vunpack.c.l.b16 %v75
    %v115 = vunpack.c.l.b16 %v76
    %v116 = vunpack.c.l.b16 %v77
    %v117 = vunpack.c.l.b16 %v78
    %v118 = vunpack.c.l.b16 %v79
    %v119 = vunpack.c.l.b16 %v80
    %v120 = vunpack.c.l.b16 %v81
    %v121 = vpack.c.b16 %v106, %v105
    %v122 = vpack.c.b16 %v108, %v107
    %v123 = vpack.c.b16 %v110, %v109
    %v124 = vpack.c.b16 %v112, %v111
    %v125 = vpack.c.b16 %v114, %v113
    %v126 = vpack.c.b16 %v116, %v115
    %v127 = vpack.c.b16 %v118, %v117
    %v128 = vpack.c.b16 %v120, %v119
    %137 = vmatprep.subr.bf16.mxu0 0
    %138 = vmatpush1.bf16.msra.mxu0 %v128
    %139 = vmatprep.subr.bf16.mxu0 0
    %140 = vmatpush1.bf16.msra.mxu0 %v127
    %141 = vmatprep.subr.bf16.mxu0 0
    %142 = vmatpush1.bf16.msra.mxu0 %v126
    %143 = vmatprep.subr.bf16.mxu0 0
    %144 = vmatpush1.bf16.msra.mxu0 %v125
    %145 = vmatprep.subr.bf16.mxu0 0
    %146 = vmatpush1.bf16.msra.mxu0 %v124
    %147 = vmatprep.subr.bf16.mxu0 0
    %148 = vmatpush1.bf16.msra.mxu0 %v123
    %149 = vmatprep.subr.bf16.mxu0 0
    %150 = vmatpush1.bf16.msra.mxu0 %v122
    %151 = vmatprep.subr.bf16.mxu0 0
    %152 = vmatpush1.bf16.msra.mxu0 %v121
    %153 = vmatprep.subr.bf16.mxu0 0
    %154 = vmatpush2.bf16.msra.mxu0 0
    %155 = vmatprep.subr.bf16.mxu0 0
    %156 = vmatpush2.bf16.msra.mxu0 0
    %157 = vmatprep.subr.bf16.mxu0 0
    %158 = vmatpush2.bf16.msra.mxu0 0
    %159 = vmatprep.subr.bf16.mxu0 0
    %160 = vmatpush2.bf16.msra.mxu0 0
    %161 = vmatprep.subr.bf16.mxu0 0
    %162 = vmatpush2.bf16.msra.mxu0 0
    %163 = vmatprep.subr.bf16.mxu0 0
    %164 = vmatpush2.bf16.msra.mxu0 0
    %165 = vmatprep.subr.bf16.mxu0 0
    %166 = vmatpush2.bf16.msra.mxu0 0
    %167 = vmatprep.subr.bf16.mxu0 0
    %168 = vmatpush2.bf16.msra.mxu0 0
    %169 = vmatprep.mubr.bf16.mxu0 0
    %170 = vmatmul.mubr.bf16.gmra.mxu0 %v65
    %v171 = vpop.f32.mrf.mxu0
    %v172 = vadd.f32 %v87, %v171
    %v173 = vpop.f32.mrf.mxu0
    %v174 = vpop.f32.mrf.mxu0
    %v175 = vadd.f32 %v87, %v174
    %v176 = vpop.f32.mrf.mxu0
    %177 = vdwg.mxu0
    %v178 = vmul.f32 %v172, 0.5
    %v179 = vmul.f32 %v175, 0.5
    %v180 = vmul.f32 %v172, 0.70710677
    %v181 = vmul.f32 %v175, 0.70710677
    %v182 = verf.f32.pop %v180
    %v183 = verf.f32.pop %v181
    %v184 = vadd.f32 %v182, 1.0
    %v185 = vadd.f32 %v183, 1.0
    %v186 = vmul.f32 %v178, %v184
    %v187 = vmul.f32 %v179, %v185
    %v188 = vpack.c.bf16 %v187, %v186
    %v189 = vld [vmem:[#allocation7] sm:$0xf]
    %v190 = vld [vmem:[#allocation7 + $0x4] sm:$0xf]
    %v191 = vld [vmem:[#allocation7 + $0x8] sm:$0xf]
    %v192 = vld [vmem:[#allocation7 + $0xc] sm:$0xf]
    %v193 = vld [vmem:[#allocation7 + $0x10] sm:$0xf]
    %v194 = vld [vmem:[#allocation7 + $0x14] sm:$0xf]
    %v195 = vld [vmem:[#allocation7 + $0x18] sm:$0xf]
    %v196 = vld [vmem:[#allocation7 + $0x1c] sm:$0xf]
    %v197 = vld [vmem:[#allocation7 + $0x20] sm:$0xf]
    %v198 = vld [vmem:[#allocation7 + $0x24] sm:$0xf]
    %v199 = vld [vmem:[#allocation7 + $0x28] sm:$0xf]
    %v200 = vld [vmem:[#allocation7 + $0x2c] sm:$0xf]
    %v201 = vld [vmem:[#allocation7 + $0x30] sm:$0xf]
    %v202 = vld [vmem:[#allocation7 + $0x34] sm:$0xf]
    %v203 = vld [vmem:[#allocation7 + $0x38] sm:$0xf]
    %v204 = vld [vmem:[#allocation7 + $0x3c] sm:$0xf]
    %v205 = vld [vmem:[%s4] sm:$0x1]
    %v207 = vlaneseq
    %v208 = vshrl.u32 %v207, 7
    %v209 = vsub.s32 0, %v208
    %v210 = vrot.slane %v205, %v209
    %v228 = vunpack.c.l.b16 %v189
    %v229 = vunpack.c.l.b16 %v190
    %v230 = vunpack.c.l.b16 %v191
    %v231 = vunpack.c.l.b16 %v192
    %v232 = vunpack.c.l.b16 %v193
    %v233 = vunpack.c.l.b16 %v194
    %v234 = vunpack.c.l.b16 %v195
    %v235 = vunpack.c.l.b16 %v196
    %v236 = vunpack.c.l.b16 %v197
    %v237 = vunpack.c.l.b16 %v198
    %v238 = vunpack.c.l.b16 %v199
    %v239 = vunpack.c.l.b16 %v200
    %v240 = vunpack.c.l.b16 %v201
    %v241 = vunpack.c.l.b16 %v202
    %v242 = vunpack.c.l.b16 %v203
    %v243 = vunpack.c.l.b16 %v204
    %v244 = vpack.c.b16 %v229, %v228
    %v245 = vpack.c.b16 %v231, %v230
    %v246 = vpack.c.b16 %v233, %v232
    %v247 = vpack.c.b16 %v235, %v234
    %v248 = vpack.c.b16 %v237, %v236
    %v249 = vpack.c.b16 %v239, %v238
    %v250 = vpack.c.b16 %v241, %v240
    %v251 = vpack.c.b16 %v243, %v242
    %260 = vmatprep.subr.bf16.mxu0 0
    %261 = vmatpush1.bf16.msra.mxu0 %v251
    %262 = vmatprep.subr.bf16.mxu0 0
    %263 = vmatpush1.bf16.msra.mxu0 %v250
    %264 = vmatprep.subr.bf16.mxu0 0
    %265 = vmatpush1.bf16.msra.mxu0 %v249
    %266 = vmatprep.subr.bf16.mxu0 0
    %267 = vmatpush1.bf16.msra.mxu0 %v248
    %268 = vmatprep.subr.bf16.mxu0 0
    %269 = vmatpush1.bf16.msra.mxu0 %v247
    %270 = vmatprep.subr.bf16.mxu0 0
    %271 = vmatpush1.bf16.msra.mxu0 %v246
    %272 = vmatprep.subr.bf16.mxu0 0
    %273 = vmatpush1.bf16.msra.mxu0 %v245
    %274 = vmatprep.subr.bf16.mxu0 0
    %275 = vmatpush1.bf16.msra.mxu0 %v244
    %276 = vmatprep.subr.bf16.mxu0 0
    %277 = vmatpush2.bf16.msra.mxu0 0
    %278 = vmatprep.subr.bf16.mxu0 0
    %279 = vmatpush2.bf16.msra.mxu0 0
    %280 = vmatprep.subr.bf16.mxu0 0
    %281 = vmatpush2.bf16.msra.mxu0 0
    %282 = vmatprep.subr.bf16.mxu0 0
    %283 = vmatpush2.bf16.msra.mxu0 0
    %284 = vmatprep.subr.bf16.mxu0 0
    %285 = vmatpush2.bf16.msra.mxu0 0
    %286 = vmatprep.subr.bf16.mxu0 0
    %287 = vmatpush2.bf16.msra.mxu0 0
    %288 = vmatprep.subr.bf16.mxu0 0
    %289 = vmatpush2.bf16.msra.mxu0 0
    %290 = vmatprep.subr.bf16.mxu0 0
    %291 = vmatpush2.bf16.msra.mxu0 0
    %292 = vmatprep.mubr.bf16.mxu0 0
    %293 = vmatmul.mubr.bf16.gmra.mxu0 %v188
    %v294 = vpop.f32.mrf.mxu0
    %v295 = vadd.f32 %v210, %v294
    %v296 = vpop.f32.mrf.mxu0
    %v297 = vpop.f32.mrf.mxu0
    %v298 = vadd.f32 %v210, %v297
    %v299 = vpop.f32.mrf.mxu0
    %300 = vdwg.mxu0
    %301 = vst [vmem:[#allocation8] sm:$0xff] %v295
    %302 = vst [vmem:[#allocation8 + $0x8] sm:$0xff] %v298
    // Predicated region
    $region34: #{tpu_custom_call.1} parent=1 // pred_check
      _
    $region35: #{tpu_custom_call.1} parent=1 // pred_check_branch
      %304 = sbr.rel (0) target = $region37
    $region36: #{tpu_custom_call.1} parent=1 // pred_region
      %s306 = ssub.s32 256, 256
      %307 = vsyncadd [#allocation4], %s306
      %s308 = sshll.u32 [#allocation8], 4
      %s309 = int_to_ptr.vmem [resolvable:$true] %s308
      %314 = dma.vmem_to_hbm [thread:$0]  %s309, 256, %s5, [#allocation4], 128, 128, 8
    $region37: #{tpu_custom_call.1} parent=1 // pred_fallthru
      _
    // Predicated region
    $region38: #{tpu_custom_call.1} parent=1 // pred_check
      _
    $region39: #{tpu_custom_call.1} parent=1 // pred_check_branch
      %316 = sbr.rel (0) target = $region41
    $region40: #{tpu_custom_call.1} parent=1 // pred_region
      %317 = dma.done [#allocation4], 256
    $region41: #{tpu_custom_call.1} parent=1 // pred_fallthru
      _
    %318 = vsyncpa [#allocation3], 1
    %319 = vsyncpa [#allocation6], 1
    %320 = vsyncpa [#allocation4], 1

</llo_original>
